<compile_context>
chip_gen: v5e
topology: v5e:2x2
jax: 0.10.0
libtpu: 0.0.40
codegen_flags: <defaults>
</compile_context>

<pallas_src>
import functools
import math

import jax
import jax.numpy as jnp
from jax import lax
from jax.experimental import pallas as pl
from jax.experimental.pallas import tpu as pltpu


def _round_up(x, m):
    return ((x + m - 1) // m) * m


def _attn_kernel(scale, with_weights, vl_ref, q_ref, k_ref, v_ref, o_ref,
                 *maybe_w_ref):
    """One grid step handles TB batch elements.

    vl_ref : VMEM (TB, Q, 1) int32  per-(batch, query) valid key length
    q_ref  : VMEM (TB, Q, Dp)
    k_ref  : VMEM (TB, K, Dp)
    v_ref  : VMEM (TB, K, Vp)
    o_ref  : VMEM (TB, Q, Vp)
    w_ref  : VMEM (TB, Q, K)  (optional attention weights)
    """
    q = q_ref[...]
    k = k_ref[...]

    # scores = Q @ K^T / sqrt(d) — batched contraction on the last dim,
    # no explicit transpose, f32 accumulation on the MXU.
    scores = lax.dot_general(
        q, k,
        dimension_numbers=(((2,), (2,)), ((0,), (0,))),
        preferred_element_type=jnp.float32)
    scores = scores * jnp.float32(scale)

    # masked softmax: columns j >= valid_len get -1e6 before softmax.
    col = lax.broadcasted_iota(jnp.int32, scores.shape, 2)
    scores = jnp.where(col < vl_ref[...], scores, jnp.float32(-1e6))

    m = jnp.max(scores, axis=-1, keepdims=True)
    p = jnp.exp(scores - m)
    denom = jnp.sum(p, axis=-1, keepdims=True)
    w = p * pl.reciprocal(denom, approx=True)          # (TB, Q, K), f32

    if with_weights:
        maybe_w_ref[0][...] = w.astype(maybe_w_ref[0].dtype)

    # output = weights @ V — weights cast to value dtype so the MXU sees
    # native (e.g. bf16) operands with f32 accumulation.
    out = lax.dot_general(
        w.astype(v_ref.dtype), v_ref[...],
        dimension_numbers=(((2,), (1,)), ((0,), (0,))),
        preferred_element_type=jnp.float32)
    o_ref[...] = out.astype(o_ref.dtype)


def dot_product_attention(queries, keys, values, valid_lens=None,
                          return_attention_weights=False):
    """Pallas equivalent of DotProductAttention.forward (eval mode).

    queries: (B, Q, D), keys: (B, K, D), values: (B, K, V)
    valid_lens: None, (B,) int, or (B, Q) int.
    Returns output (B, Q, V) [, attention_weights (B, Q, K)].
    """
    B, Q, D = queries.shape
    _, K, _ = keys.shape
    _, _, V = values.shape
    scale = 1.0 / math.sqrt(D)          # scale uses the ORIGINAL feature dim
    dtype = queries.dtype

    # --- valid_lens -> per-(batch, query) int32 lengths ---
    if valid_lens is None:
        vl = jnp.full((B, Q), K, dtype=jnp.int32)
    else:
        valid_lens = valid_lens.astype(jnp.int32)
        if valid_lens.ndim == 1:
            vl = jnp.broadcast_to(valid_lens[:, None], (B, Q))
        else:
            vl = valid_lens                      # (B, Q)

    # --- lane padding: D, V -> multiples of 128 (zero padding is exact) ---
    Dp = _round_up(D, 128)
    Vp = _round_up(V, 128)
    if Dp != D:
        queries = jnp.pad(queries, ((0, 0), (0, 0), (0, Dp - D)))
        keys = jnp.pad(keys, ((0, 0), (0, 0), (0, Dp - D)))
    if Vp != V:
        values = jnp.pad(values, ((0, 0), (0, 0), (0, Vp - V)))

    # --- batch blocking: target ~256 MXU rows per step, cap by VMEM budget ---
    itemsize = jnp.dtype(dtype).itemsize
    tb = max(1, min(B, 256 // max(Q, 1)))
    per_b = ((Q * Dp + K * Dp + K * Vp + Q * Vp) * itemsize
             + Q * K * 4 * (2 if return_attention_weights else 1))
    budget = 8 * 1024 * 1024            # per-step working set (leaves room for
    while tb > 1 and 2 * tb * per_b > budget:   # double buffering on all chips)
        tb //= 2

    Bp = _round_up(B, tb)
    if Bp != B:
        pad = Bp - B
        queries = jnp.pad(queries, ((0, pad), (0, 0), (0, 0)))
        keys = jnp.pad(keys, ((0, pad), (0, 0), (0, 0)))
        values = jnp.pad(values, ((0, pad), (0, 0), (0, 0)))
        vl = jnp.pad(vl, ((0, pad), (0, 0)), constant_values=K)
    vl = vl.reshape(Bp, Q, 1)

    grid = (Bp // tb,)
    in_specs = [
        pl.BlockSpec((tb, Q, 1), lambda i: (i, 0, 0)),
        pl.BlockSpec((tb, Q, Dp), lambda i: (i, 0, 0)),
        pl.BlockSpec((tb, K, Dp), lambda i: (i, 0, 0)),
        pl.BlockSpec((tb, K, Vp), lambda i: (i, 0, 0)),
    ]
    out_shapes = [jax.ShapeDtypeStruct((Bp, Q, Vp), dtype)]
    out_specs = [pl.BlockSpec((tb, Q, Vp), lambda i: (i, 0, 0))]
    if return_attention_weights:
        out_shapes.append(jax.ShapeDtypeStruct((Bp, Q, K), jnp.float32))
        out_specs.append(pl.BlockSpec((tb, Q, K), lambda i: (i, 0, 0)))

    kernel = functools.partial(_attn_kernel, scale, return_attention_weights)
    results = pl.pallas_call(
        kernel,
        out_shape=tuple(out_shapes),
        grid=grid,
        in_specs=in_specs,
        out_specs=tuple(out_specs),
        compiler_params=pltpu.CompilerParams(
            dimension_semantics=("parallel",)),
    )(vl, queries, keys, values)

    if return_attention_weights:
        out, w = results
        return out[:B, :, :V], w[:B]
    out = results[0]
    return out[:B, :, :V]


def _reference(queries, keys, values, valid_lens):
    """Pure-JAX reference mirroring the PyTorch module (eval mode)."""
    d = queries.shape[-1]
    scores = jnp.einsum("bqd,bkd->bqk", queries, keys) / math.sqrt(d)
    if valid_lens is not None:
        _, _, K = scores.shape
        col = jnp.arange(K)[None, None, :]
        if valid_lens.ndim == 1:
            vlb = valid_lens[:, None, None]
        else:
            vlb = valid_lens[:, :, None]
        scores = jnp.where(col < vlb, scores, -1e6)
    w = jax.nn.softmax(scores, axis=-1)
    return jnp.einsum("bqk,bkv->bqv", w, values), w


if __name__ == "__main__":
    key = jax.random.PRNGKey(0)
    kq, kk, kv = jax.random.split(key, 3)

    B, Q, K, D, V = 2, 8, 8, 32, 32
    queries = jax.random.normal(kq, (B, Q, D), dtype=jnp.float32)
    keys = jax.random.normal(kk, (B, K, D), dtype=jnp.float32)
    values = jax.random.normal(kv, (B, K, V), dtype=jnp.float32)
    valid_lens = jnp.array([3, 6], dtype=jnp.int32)

    # Plain forward pass (module's return value: output only).
    out = dot_product_attention(queries, keys, values, valid_lens)
    out = jax.block_until_ready(out)

    # Optional attention-weights output (matches self.attention_weights).
    out_w, attn_w = dot_product_attention(queries, keys, values, valid_lens,
                                          return_attention_weights=True)
    out_w = jax.block_until_ready(out_w)
    attn_w = jax.block_until_ready(attn_w)

    ref_out, ref_w = _reference(queries, keys, values, valid_lens)
    assert jnp.allclose(out, ref_out, atol=2e-3, rtol=2e-3), "output mismatch"
    assert jnp.allclose(out_w, ref_out, atol=2e-3, rtol=2e-3), "output(w) mismatch"
    assert jnp.allclose(attn_w, ref_w, atol=2e-3, rtol=2e-3), "weights mismatch"

    # valid_lens=None path (plain softmax over all keys).
    out_none = dot_product_attention(queries, keys, values, None)
    ref_none, _ = _reference(queries, keys, values, None)
    assert jnp.allclose(jax.block_until_ready(out_none), ref_none,
                        atol=2e-3, rtol=2e-3), "valid_lens=None mismatch"

    print("KERNEL_OK")
</pallas_src>

<mosaic_0001>
module attributes {stable_mosaic.version = 11 : i64} {
  func.func @_attn_kernel(%arg0: i32, %arg1: memref<2x8x1xi32, #tpu.memory_space<vmem>>, %arg2: memref<2x8x128xf32, #tpu.memory_space<vmem>>, %arg3: memref<2x8x128xf32, #tpu.memory_space<vmem>>, %arg4: memref<2x8x128xf32, #tpu.memory_space<vmem>>, %arg5: memref<2x8x128xf32, #tpu.memory_space<vmem>>) attributes {dimension_semantics = [#tpu.dimension_semantics<parallel>], iteration_bounds = array<i64: 1>, scalar_prefetch = 0 : i64, scratch_operands = 0 : i64, tpu.core_type = #tpu.core_type<tc>, window_params = [{transform_indices = @transform_0, window_bounds = array<i64: 2, 8, 1>}, {transform_indices = @transform_1, window_bounds = array<i64: 2, 8, 128>}, {transform_indices = @transform_2, window_bounds = array<i64: 2, 8, 128>}, {transform_indices = @transform_3, window_bounds = array<i64: 2, 8, 128>}, {transform_indices = @transform_4, window_bounds = array<i64: 2, 8, 128>}]} {
    %c0 = arith.constant 0 : index
    %c0_0 = arith.constant 0 : index
    %c0_1 = arith.constant 0 : index
    %0 = vector.load %arg2[%c0, %c0_0, %c0_1] : memref<2x8x128xf32, #tpu.memory_space<vmem>>, vector<2x8x128xf32>
    %c0_2 = arith.constant 0 : index
    %c0_3 = arith.constant 0 : index
    %c0_4 = arith.constant 0 : index
    %1 = vector.load %arg3[%c0_2, %c0_3, %c0_4] : memref<2x8x128xf32, #tpu.memory_space<vmem>>, vector<2x8x128xf32>
    %cst = arith.constant dense<0.000000e+00> : vector<2x8x8xf32>
    %2 = tpu.matmul %0, %1, %cst {dimension_numbers = #tpu.dot_dimension_numbers<[2], [2], [1], [1], [0, 0, 0, 1, 1, 1], [0], [0]>} : vector<2x8x128xf32>, vector<2x8x128xf32>, vector<2x8x8xf32> -> vector<2x8x8xf32>
    %cst_5 = arith.constant 0.176776692 : f32
    %3 = vector.broadcast %cst_5 : f32 to vector<2x8x8xf32>
    %4 = arith.mulf %2, %3 : vector<2x8x8xf32>
    %5 = tpu.iota {dimensions = array<i32: 2>} : vector<2x8x8xi32>
    %c0_6 = arith.constant 0 : index
    %c0_7 = arith.constant 0 : index
    %c0_8 = arith.constant 0 : index
    %6 = vector.load %arg1[%c0_6, %c0_7, %c0_8] : memref<2x8x1xi32, #tpu.memory_space<vmem>>, vector<2x8x1xi32>
    %7 = vector.broadcast %6 : vector<2x8x1xi32> to vector<2x8x8xi32>
    %8 = arith.cmpi slt, %5, %7 : vector<2x8x8xi32>
    %cst_9 = arith.constant -1.000000e+06 : f32
    %9 = vector.broadcast %cst_9 : f32 to vector<2x8x8xf32>
    %10 = arith.select %8, %4, %9 : vector<2x8x8xi1>, vector<2x8x8xf32>
    %cst_10 = arith.constant dense<0xFF800000> : vector<2x8xf32>
    %11 = vector.multi_reduction <maximumf>, %10, %cst_10 [2] : vector<2x8x8xf32> to vector<2x8xf32>
    %12 = vector.shape_cast %11 : vector<2x8xf32> to vector<2x8x1xf32>
    %13 = vector.broadcast %12 : vector<2x8x1xf32> to vector<2x8x8xf32>
    %14 = arith.subf %10, %13 : vector<2x8x8xf32>
    %15 = math.exp %14 : vector<2x8x8xf32>
    %cst_11 = arith.constant dense<0.000000e+00> : vector<2x8xf32>
    %16 = vector.multi_reduction <add>, %15, %cst_11 [2] : vector<2x8x8xf32> to vector<2x8xf32>
    %17 = vector.shape_cast %16 : vector<2x8xf32> to vector<2x8x1xf32>
    %18 = tpu.reciprocal %17 {approx = true} : vector<2x8x1xf32> -> vector<2x8x1xf32>
    %19 = vector.broadcast %18 : vector<2x8x1xf32> to vector<2x8x8xf32>
    %20 = arith.mulf %15, %19 : vector<2x8x8xf32>
    %c0_12 = arith.constant 0 : index
    %c0_13 = arith.constant 0 : index
    %c0_14 = arith.constant 0 : index
    %21 = vector.load %arg4[%c0_12, %c0_13, %c0_14] : memref<2x8x128xf32, #tpu.memory_space<vmem>>, vector<2x8x128xf32>
    %cst_15 = arith.constant dense<0.000000e+00> : vector<2x8x128xf32>
    %22 = tpu.matmul %20, %21, %cst_15 {dimension_numbers = #tpu.dot_dimension_numbers<[2], [1], [1], [2], [0, 0, 0, 1, 1, 2], [0], [0]>} : vector<2x8x8xf32>, vector<2x8x128xf32>, vector<2x8x128xf32> -> vector<2x8x128xf32>
    %c0_16 = arith.constant 0 : index
    %c0_17 = arith.constant 0 : index
    %c0_18 = arith.constant 0 : index
    %23 = vector.load %arg5[%c0_16, %c0_17, %c0_18] : memref<2x8x128xf32, #tpu.memory_space<vmem>>, vector<2x8x128xf32>
    tpu.vector_store %arg5[%c0_16, %c0_17, %c0_18], %22 {strides = array<i32>} : memref<2x8x128xf32, #tpu.memory_space<vmem>>, vector<2x8x128xf32>,
    return
  }
  func.func @transform_0(%arg0: i32) -> (i32, i32, i32) {
    %c0_i32 = arith.constant 0 : i32
    %c0_i32_0 = arith.constant 0 : i32
    %c0_i32_1 = arith.constant 0 : i32
    return %arg0, %c0_i32, %c0_i32_0 : i32, i32, i32
  }
  func.func @transform_1(%arg0: i32) -> (i32, i32, i32) {
    %c0_i32 = arith.constant 0 : i32
    %c0_i32_0 = arith.constant 0 : i32
    %c0_i32_1 = arith.constant 0 : i32
    return %arg0, %c0_i32, %c0_i32_0 : i32, i32, i32
  }
  func.func @transform_2(%arg0: i32) -> (i32, i32, i32) {
    %c0_i32 = arith.constant 0 : i32
    %c0_i32_0 = arith.constant 0 : i32
    %c0_i32_1 = arith.constant 0 : i32
    return %arg0, %c0_i32, %c0_i32_0 : i32, i32, i32
  }
  func.func @transform_3(%arg0: i32) -> (i32, i32, i32) {
    %c0_i32 = arith.constant 0 : i32
    %c0_i32_0 = arith.constant 0 : i32
    %c0_i32_1 = arith.constant 0 : i32
    return %arg0, %c0_i32, %c0_i32_0 : i32, i32, i32
  }
  func.func @transform_4(%arg0: i32) -> (i32, i32, i32) {
    %c0_i32 = arith.constant 0 : i32
    %c0_i32_0 = arith.constant 0 : i32
    %c0_i32_1 = arith.constant 0 : i32
    return %arg0, %c0_i32, %c0_i32_0 : i32, i32, i32
  }
}

</mosaic_0001>

<llo_original>
// kernel: tpu_custom_call.1
$region0: #{tpu_custom_call.1}
  #allocation0 [shape = 'u32[]', space=smem, size = 0x4, offset = 0x4, fixed_abs, tag = 'smem constant byte address 0x4 - core index']
  #allocation1 [shape = 'u32[72,128]{1,0:T(1,128)}', space=vmem, size = 0x9000, scoped, tag = 'internal scratch']
  %s0 = inlined_call_operand.vmem [shape: s32[2,8,1], index: 0, kind: input, shape index: {}]
  %s1 = inlined_call_operand.vmem [shape: f32[2,8,128], index: 1, kind: input, shape index: {}]
  %s2 = inlined_call_operand.hbm [shape: f32[2,8,128], index: 2, kind: input, shape index: {}]
  %s3 = inlined_call_operand.hbm [shape: f32[2,8,128], index: 3, kind: input, shape index: {}]
  %s4 = inlined_call_operand.hbm [shape: f32[2,8,128], index: 4, kind: output, shape index: {}]
  %s5 = sld [smem:[#allocation0]]
  $region34: #{tpu_custom_call.1} parent=0
    _
  %s7 = ssub.s32 1, %s5
  %s8 = scalar_select 0, %s7, %s5
  $region1: #{tpu_custom_call.1} parent=0
    #allocation2 [shape = 'u8[8192]{0}', space=vmem, size = 0x2000, scoped, tag = 'input window, operand 2, single buffered']
    #allocation3 [shape = 's32[1]{0}', space=sflag, size = 0x4, scoped, tag = 'scoped memory for tpu_custom_call.1']
    #allocation4 [shape = 's32[1]{0}', space=sflag, size = 0x4, scoped, tag = 'scoped memory for tpu_custom_call.1']
    #allocation5 [shape = 'u8[8192]{0}', space=vmem, size = 0x2000, scoped, tag = 'input window, operand 3, single buffered']
    #allocation6 [shape = 's32[1]{0}', space=sflag, size = 0x4, scoped, tag = 'scoped memory for tpu_custom_call.1']
    #allocation7 [shape = 'u8[8192]{0}', space=vmem, size = 0x2000, scoped, tag = 'output window, operand 0, single buffered']
    %9 = vsyncpa [#allocation3], 0
    %10 = vsyncpa [#allocation6], 0
    %11 = vsyncpa [#allocation4], 0
    // Predicated region
    $region2: #{tpu_custom_call.1} parent=1 // pred_check
      _
    $region3: #{tpu_custom_call.1} parent=1 // pred_check_branch
      %13 = sbr.rel (0) target = $region5
    $region4: #{tpu_custom_call.1} parent=1 // pred_region
      _
    $region5: #{tpu_custom_call.1} parent=1 // pred_fallthru
      _
    // Predicated region
    $region6: #{tpu_custom_call.1} parent=1 // pred_check
      _
    $region7: #{tpu_custom_call.1} parent=1 // pred_check_branch
      %15 = sbr.rel (0) target = $region9
    $region8: #{tpu_custom_call.1} parent=1 // pred_region
      _
    $region9: #{tpu_custom_call.1} parent=1 // pred_fallthru
      _
    // Predicated region
    $region10: #{tpu_custom_call.1} parent=1 // pred_check
      _
    $region11: #{tpu_custom_call.1} parent=1 // pred_check_branch
      %17 = sbr.rel (0) target = $region13
    $region12: #{tpu_custom_call.1} parent=1 // pred_region
      %19 = vsyncadd [#allocation3], 0
      %s20 = sshll.u32 %s2, 4
      %s21 = int_to_ptr.hbm [resolvable:$true] %s20
      %s22 = sshll.u32 [#allocation2], 4
      %s23 = int_to_ptr.vmem [resolvable:$true] %s22
      %28 = dma.hbm_to_vmem [thread:$0]  %s21, 256, %s23, [#allocation3], 128, 128, 8
    $region13: #{tpu_custom_call.1} parent=1 // pred_fallthru
      _
    // Predicated region
    $region14: #{tpu_custom_call.1} parent=1 // pred_check
      _
    $region15: #{tpu_custom_call.1} parent=1 // pred_check_branch
      %30 = sbr.rel (0) target = $region17
    $region16: #{tpu_custom_call.1} parent=1 // pred_region
      %32 = vsyncadd [#allocation6], 0
      %s33 = sshll.u32 %s3, 4
      %s34 = int_to_ptr.hbm [resolvable:$true] %s33
      %s35 = sshll.u32 [#allocation5], 4
      %s36 = int_to_ptr.vmem [resolvable:$true] %s35
      %41 = dma.hbm_to_vmem [thread:$0]  %s34, 256, %s36, [#allocation6], 128, 128, 8
    $region17: #{tpu_custom_call.1} parent=1 // pred_fallthru
      _
    // Predicated region
    $region18: #{tpu_custom_call.1} parent=1 // pred_check
      _
    $region19: #{tpu_custom_call.1} parent=1 // pred_check_branch
      %43 = sbr.rel (0) target = $region21
    $region20: #{tpu_custom_call.1} parent=1 // pred_region
      %45 = dma.done [#allocation3], 256
    $region21: #{tpu_custom_call.1} parent=1 // pred_fallthru
      _
    // Predicated region
    $region22: #{tpu_custom_call.1} parent=1 // pred_check
      _
    $region23: #{tpu_custom_call.1} parent=1 // pred_check_branch
      %47 = sbr.rel (0) target = $region25
    $region24: #{tpu_custom_call.1} parent=1 // pred_region
      %49 = dma.done [#allocation6], 256
    $region25: #{tpu_custom_call.1} parent=1 // pred_fallthru
      _
    %v50 = vld [vmem:[%s1] sm:$0xff]
    %v51 = vld [vmem:[%s1 + $0x8] sm:$0xff]
    %v52 = vld [vmem:[#allocation2] sm:$0xff]
    %v53 = vld [vmem:[#allocation2 + $0x8] sm:$0xff]
    %54 = vmatpush.xpose.msra.mxu0 0.0
    %55 = vmatpush.xpose.msra.mxu0 0.0
    %56 = vmatpush.xpose.msra.mxu0 0.0
    %57 = vmatpush.xpose.msra.mxu0 0.0
    %58 = vmatpush.xpose.msra.mxu0 0.0
    %59 = vmatpush.xpose.msra.mxu0 0.0
    %60 = vmatpush.xpose.msra.mxu0 0.0
    %61 = vmatpush.xpose.msra.mxu0 0.0
    %62 = vmatpush.xpose.msra.mxu0 0.0
    %63 = vmatpush.xpose.msra.mxu0 0.0
    %64 = vmatpush.xpose.msra.mxu0 0.0
    %65 = vmatpush.xpose.msra.mxu0 0.0
    %66 = vmatpush.xpose.msra.mxu0 0.0
    %67 = vmatpush.xpose.msra.mxu0 0.0
    %68 = vmatpush.xpose.msra.mxu0 0.0
    %69 = vmatpush.xpose.msra.mxu0 %v52
    %70 = vmatmul.f32.gmra.mxu0 %v50
    %v71 = vpop.f32.mrf.mxu0
    %v72 = vadd.f32 0.0, %v71
    %73 = vdwg.mxu0
    %74 = vmatpush.xpose.msra.mxu0 0.0
    %75 = vmatpush.xpose.msra.mxu0 0.0
    %76 = vmatpush.xpose.msra.mxu0 0.0
    %77 = vmatpush.xpose.msra.mxu0 0.0
    %78 = vmatpush.xpose.msra.mxu0 0.0
    %79 = vmatpush.xpose.msra.mxu0 0.0
    %80 = vmatpush.xpose.msra.mxu0 0.0
    %81 = vmatpush.xpose.msra.mxu0 0.0
    %82 = vmatpush.xpose.msra.mxu0 0.0
    %83 = vmatpush.xpose.msra.mxu0 0.0
    %84 = vmatpush.xpose.msra.mxu0 0.0
    %85 = vmatpush.xpose.msra.mxu0 0.0
    %86 = vmatpush.xpose.msra.mxu0 0.0
    %87 = vmatpush.xpose.msra.mxu0 0.0
    %88 = vmatpush.xpose.msra.mxu0 0.0
    %89 = vmatpush.xpose.msra.mxu0 %v53
    %90 = vmatmul.f32.gmra.mxu0 %v51
    %v91 = vpop.f32.mrf.mxu0
    %v92 = vadd.f32 0.0, %v91
    %93 = vdwg.mxu0
    %v94 = vmul.f32 %v72, 0.17677669
    %v95 = vmul.f32 %v92, 0.17677669
    %v96 = vlaneseq
    %v97 = vand.u32 %v96, 127
    %v98 = vld [vmem:[%s0] sm:$0xff]
    %v99 = vld [vmem:[%s0 + $0x8] sm:$0xff]
    %100 = vset.pattern.permute.xlu0 0
    %101 = vperm.xlu0 %100, %v98
    %v102 = vpop.permute.xlu0 %101
    %103 = vset.pattern.permute.xlu0 0
    %104 = vperm.xlu0 %103, %v99
    %v105 = vpop.permute.xlu0 %104
    %vm106 = vcmp.lt.s32.totalorder %v97, %v102
    %vm107 = vcmp.lt.s32.totalorder %v97, %v105
    %v108 = vsel %vm106, %v94, -1000000.0
    %v109 = vsel %vm107, %v95, -1000000.0
    %vm110 = vcmask 64512
    %v111 = vsel %vm110, %v108, -inf
    %112 = vmax.xlane.f32.xlu0 %v111
    %v113 = vpop.xlane.xlu0 %112
    %v114 = vsel %vm110, %v109, -inf
    %115 = vmax.xlane.f32.xlu0 %v114
    %v116 = vpop.xlane.xlu0 %115
    %v117 = vsub.f32 %v108, %v113
    %v118 = vsub.f32 %v109, %v116
    %v119 = vmul.f32 %v117, 1.442695
    %v120 = vpow.pop %v119
    %v121 = vmul.f32 %v118, 1.442695
    %v122 = vpow.pop %v121
    %v123 = vsel %vm110, %v120, 0.0
    %124 = vadd.xlane.f32.xlu0 %v123
    %v125 = vpop.xlane.xlu0 %124
    %v126 = vsel %vm110, %v122, 0.0
    %127 = vadd.xlane.f32.xlu0 %v126
    %v128 = vpop.xlane.xlu0 %127
    %v129 = vrcp.pop %v125
    %v130 = vrcp.pop %v128
    %v131 = vmul.f32 %v120, %v129
    %v132 = vmul.f32 %v122, %v130
    %v133 = vld [vmem:[#allocation5] sm:$0xff]
    %v134 = vld [vmem:[#allocation5 + $0x8] sm:$0xff]
    %v136 = vsel %vm110, %v131, 0
    %138 = vmatpush.msra.mxu0 0.0
    %139 = vmatpush.msra.mxu0 0.0
    %140 = vmatpush.msra.mxu0 0.0
    %141 = vmatpush.msra.mxu0 0.0
    %142 = vmatpush.msra.mxu0 0.0
    %143 = vmatpush.msra.mxu0 0.0
    %144 = vmatpush.msra.mxu0 0.0
    %145 = vmatpush.msra.mxu0 0.0
    %146 = vmatpush.msra.mxu0 0.0
    %147 = vmatpush.msra.mxu0 0.0
    %148 = vmatpush.msra.mxu0 0.0
    %149 = vmatpush.msra.mxu0 0.0
    %150 = vmatpush.msra.mxu0 0.0
    %151 = vmatpush.msra.mxu0 0.0
    %152 = vmatpush.msra.mxu0 0.0
    %153 = vmatpush.msra.mxu0 %v133
    %154 = vmatmul.f32.gmra.mxu0 %v136
    %v155 = vpop.f32.mrf.mxu0
    %v156 = vadd.f32 0.0, %v155
    %157 = vdwg.mxu0
    %v159 = vsel %vm110, %v132, 0
    %161 = vmatpush.msra.mxu0 0.0
    %162 = vmatpush.msra.mxu0 0.0
    %163 = vmatpush.msra.mxu0 0.0
    %164 = vmatpush.msra.mxu0 0.0
    %165 = vmatpush.msra.mxu0 0.0
    %166 = vmatpush.msra.mxu0 0.0
    %167 = vmatpush.msra.mxu0 0.0
    %168 = vmatpush.msra.mxu0 0.0
    %169 = vmatpush.msra.mxu0 0.0
    %170 = vmatpush.msra.mxu0 0.0
    %171 = vmatpush.msra.mxu0 0.0
    %172 = vmatpush.msra.mxu0 0.0
    %173 = vmatpush.msra.mxu0 0.0
    %174 = vmatpush.msra.mxu0 0.0
    %175 = vmatpush.msra.mxu0 0.0
    %176 = vmatpush.msra.mxu0 %v134
    %177 = vmatmul.f32.gmra.mxu0 %v159
    %v178 = vpop.f32.mrf.mxu0
    %v179 = vadd.f32 0.0, %v178
    %180 = vdwg.mxu0
    %181 = vst [vmem:[#allocation7] sm:$0xff] %v156
    %182 = vst [vmem:[#allocation7 + $0x8] sm:$0xff] %v179
    // Predicated region
    $region26: #{tpu_custom_call.1} parent=1 // pred_check
      _
    $region27: #{tpu_custom_call.1} parent=1 // pred_check_branch
      %184 = sbr.rel (0) target = $region29
    $region28: #{tpu_custom_call.1} parent=1 // pred_region
      %186 = vsyncadd [#allocation4], 0
      %s187 = sshll.u32 [#allocation7], 4
      %s188 = int_to_ptr.vmem [resolvable:$true] %s187
      %s189 = sshll.u32 %s4, 4
      %s190 = int_to_ptr.hbm [resolvable:$true] %s189
      %195 = dma.vmem_to_hbm [thread:$0]  %s188, 256, %s190, [#allocation4], 128, 128, 8
    $region29: #{tpu_custom_call.1} parent=1 // pred_fallthru
      _
    // Predicated region
    $region30: #{tpu_custom_call.1} parent=1 // pred_check
      _
    $region31: #{tpu_custom_call.1} parent=1 // pred_check_branch
      %197 = sbr.rel (0) target = $region33
    $region32: #{tpu_custom_call.1} parent=1 // pred_region
      %199 = dma.done [#allocation4], 256
    $region33: #{tpu_custom_call.1} parent=1 // pred_fallthru
      _
    %200 = vsyncpa [#allocation3], 1
    %201 = vsyncpa [#allocation6], 1
    %202 = vsyncpa [#allocation4], 1

</llo_original>
